<compile_context>
chip_gen: v7x
topology: tpu7x:2x2x1
jax: 0.10.0
libtpu: 0.0.40
codegen_flags: <defaults>
</compile_context>

<pallas_src>
import math

import jax
import jax.numpy as jnp
from jax.experimental import pallas as pl
from jax.experimental.pallas import tpu as pltpu


def _round_up(x, m):
    return ((x + m - 1) // m) * m


def _vdp_kernel(mu_ref, y_ref, f_ref, g_ref):
    # mu_ref: SMEM (1,) f32
    # y_ref : VMEM (R, 128)  flat interleaved [y0, y1, y0, y1, ...]
    # f_ref : VMEM (R, 128)  flat interleaved [f0, f1, ...]
    # g_ref : VMEM (R, 128)  flat interleaved [d10, d11, ...]
    mu = mu_ref[0]
    x = y_ref[...].astype(jnp.float32)

    lane = jax.lax.broadcasted_iota(jnp.int32, x.shape, 1)
    is_even = (lane & 1) == 0                    # lane 2k: y0_k ; lane 2k+1: y1_k

    # Pair-partner exchange on the XLU (lane rotations).  Pairs never straddle
    # a 128-lane row, so the wrapped-around lanes are never selected.
    from_hi = pltpu.roll(x, shift=127, axis=1)   # lane i <- x[i + 1]
    from_lo = pltpu.roll(x, shift=1, axis=1)     # lane i <- x[i - 1]

    y0 = jnp.where(is_even, x, from_lo)          # pair's y0 on both lanes
    y1 = jnp.where(is_even, from_hi, x)          # pair's y1 on both lanes

    w = mu * (1.0 - y0 * y0)                     # shared by f1 and d11
    f1 = -y0 + w * y1
    d10 = -1.0 - 2.0 * mu * y0 * y1

    f_ref[...] = jnp.where(is_even, y1, f1).astype(f_ref.dtype)
    g_ref[...] = jnp.where(is_even, d10, w).astype(g_ref.dtype)


def vanderpol_ode(t, y, mu, *, max_rows_per_tile=2048):
    """Pallas equivalent of VanderPolODE(mu).forward(t, y).

    t is unused (kept for ODE-solver signature parity).
    y: float array with trailing dim 2.  Returns (f, df) with shapes
    y.shape and y.shape + (2,), in y's dtype.
    """
    del t
    assert y.shape[-1] == 2, "state dimension must be 2"
    orig_dtype = y.dtype
    batch_shape = y.shape[:-1]
    B = max(int(math.prod(batch_shape)), 1)

    # Keep I/O in bf16 when the model runs bf16; otherwise f32.
    # TODO(synk): float64 (x64) inputs are computed in f32 and cast back.
    io_dtype = jnp.bfloat16 if y.dtype == jnp.bfloat16 else jnp.float32

    n = 2 * B                                      # flat interleaved length
    rows = _round_up(pl.cdiv(n, 128), 8)           # sublane rows, multiple of 8
    row_tile = min(max_rows_per_tile, rows)        # both are multiples of 8
    rows_p = _round_up(rows, row_tile)
    num_tiles = rows_p // row_tile
    n_pad = rows_p * 128

    y_flat = y.reshape(-1).astype(io_dtype)
    if n_pad != n:
        y_flat = jnp.pad(y_flat, (0, n_pad - n))
    y_blk = y_flat.reshape(rows_p, 128)            # contiguous reshape, no transpose

    mu_arr = jnp.asarray([mu], dtype=jnp.float32)

    itemsize = jnp.dtype(io_dtype).itemsize
    cost = pl.CostEstimate(
        flops=10 * n_pad,                          # ~10 VALU ops per lane
        transcendentals=0,
        bytes_accessed=3 * n_pad * itemsize,       # 1 block read + 2 written
    )

    f_blk, g_blk = pl.pallas_call(
        _vdp_kernel,
        out_shape=(
            jax.ShapeDtypeStruct((rows_p, 128), io_dtype),
            jax.ShapeDtypeStruct((rows_p, 128), io_dtype),
        ),
        grid=(num_tiles,),
        in_specs=[
            pl.BlockSpec(memory_space=pltpu.MemorySpace.SMEM),   # mu scalar
            pl.BlockSpec((row_tile, 128), lambda i: (i, 0)),     # y tile
        ],
        out_specs=(
            pl.BlockSpec((row_tile, 128), lambda i: (i, 0)),     # f tile
            pl.BlockSpec((row_tile, 128), lambda i: (i, 0)),     # [d10,d11] tile
        ),
        compiler_params=pltpu.CompilerParams(
            dimension_semantics=("parallel",),
        ),
        cost_estimate=cost,
    )(mu_arr, y_blk)

    # f comes back already in the PyTorch (..., 2) interleaved layout.
    f = f_blk.reshape(-1)[:n].reshape(*batch_shape, 2).astype(orig_dtype)

    # df: constant top row [0, 1], computed bottom row [d10, d11].
    # TODO(synk): if the downstream implicit solver can consume the 2x2
    # structure (constant top row) directly, return `bottom` as-is and skip
    # this concat (removes the only remaining wrapper-side HBM pass).
    bottom = g_blk.reshape(-1)[:n].reshape(*batch_shape, 1, 2)
    top = jnp.broadcast_to(
        jnp.asarray([0.0, 1.0], dtype=bottom.dtype), batch_shape + (1, 2)
    )
    df = jnp.concatenate([top, bottom], axis=-2).astype(orig_dtype)
    return f, df


def _reference(t, y, mu):
    """Pure-JAX reference mirroring the PyTorch forward."""
    del t
    y0 = y[..., 0]
    y1 = y[..., 1]
    f = jnp.stack([y1, -y0 + mu * (1.0 - y0 ** 2.0) * y1], axis=-1)
    d00 = jnp.zeros_like(y0)
    d01 = jnp.ones_like(y0)
    d10 = -1.0 - 2.0 * mu * y0 * y1
    d11 = mu * (1.0 - y0 ** 2.0)
    df = jnp.stack(
        [jnp.stack([d00, d01], axis=-1), jnp.stack([d10, d11], axis=-1)],
        axis=-2,
    )
    return f, df


if __name__ == "__main__":
    mu = 2.5
    t = jnp.float32(0.0)

    # Small batch of states, trailing state dim = 2.
    y = jax.random.uniform(
        jax.random.PRNGKey(0), (8, 2), dtype=jnp.float32, minval=-1.0, maxval=1.0
    )
    f, df = vanderpol_ode(t, y, mu)
    jax.block_until_ready((f, df))
    f_ref, df_ref = _reference(t, y, mu)
    assert f.shape == y.shape and df.shape == y.shape + (2,)
    assert jnp.allclose(f, f_ref, atol=1e-6, rtol=1e-6)
    assert jnp.allclose(df, df_ref, atol=1e-6, rtol=1e-6)

    # Multi-dim batch (exercises padding + reshape of batch dims).
    y2 = jax.random.uniform(
        jax.random.PRNGKey(1), (3, 5, 2), dtype=jnp.float32, minval=-1.0, maxval=1.0
    )
    f2, df2 = vanderpol_ode(t, y2, mu)
    jax.block_until_ready((f2, df2))
    f2_ref, df2_ref = _reference(t, y2, mu)
    assert f2.shape == y2.shape and df2.shape == y2.shape + (2,)
    assert jnp.allclose(f2, f2_ref, atol=1e-6, rtol=1e-6)
    assert jnp.allclose(df2, df2_ref, atol=1e-6, rtol=1e-6)

    # Multi-tile grid path (small tile cap so >1 grid step is exercised cheaply).
    y3 = jax.random.uniform(
        jax.random.PRNGKey(2), (1000, 2), dtype=jnp.float32, minval=-1.0, maxval=1.0
    )
    f3, df3 = vanderpol_ode(t, y3, mu, max_rows_per_tile=8)
    jax.block_until_ready((f3, df3))
    f3_ref, df3_ref = _reference(t, y3, mu)
    assert f3.shape == y3.shape and df3.shape == y3.shape + (2,)
    assert jnp.allclose(f3, f3_ref, atol=1e-6, rtol=1e-6)
    assert jnp.allclose(df3, df3_ref, atol=1e-6, rtol=1e-6)

    print("KERNEL_OK")
</pallas_src>

<mosaic_0001>
module attributes {stable_mosaic.version = 11 : i64} {
  func.func @_vdp_kernel(%arg0: i32, %arg1: memref<1xf32, #tpu.memory_space<smem>>, %arg2: memref<8x128xf32, #tpu.memory_space<vmem>>, %arg3: memref<8x128xf32, #tpu.memory_space<vmem>>, %arg4: memref<8x128xf32, #tpu.memory_space<vmem>>) attributes {dimension_semantics = [#tpu.dimension_semantics<parallel>], iteration_bounds = array<i64: 1>, scalar_prefetch = 0 : i64, scratch_operands = 0 : i64, tpu.core_type = #tpu.core_type<tc>, window_params = [{transform_indices = @transform_0, window_bounds = array<i64: 1>}, {transform_indices = @transform_1, window_bounds = array<i64: 8, 128>}, {transform_indices = @transform_2, window_bounds = array<i64: 8, 128>}, {transform_indices = @transform_3, window_bounds = array<i64: 8, 128>}]} {
    %c0 = arith.constant 0 : index
    %0 = memref.load %arg1[%c0] : memref<1xf32, #tpu.memory_space<smem>>
    %c0_0 = arith.constant 0 : index
    %c0_1 = arith.constant 0 : index
    %1 = vector.load %arg2[%c0_0, %c0_1] : memref<8x128xf32, #tpu.memory_space<vmem>>, vector<8x128xf32>
    %2 = tpu.iota {dimensions = array<i32: 1>} : vector<8x128xi32>
    %c1_i32 = arith.constant 1 : i32
    %3 = vector.broadcast %c1_i32 : i32 to vector<8x128xi32>
    %4 = arith.andi %2, %3 : vector<8x128xi32>
    %c0_i32 = arith.constant 0 : i32
    %5 = vector.broadcast %c0_i32 : i32 to vector<8x128xi32>
    %6 = arith.cmpi eq, %4, %5 : vector<8x128xi32>
    %c127_i32 = arith.constant 127 : i32
    %7 = tpu.dynamic_rotate %1 by %c127_i32 dim 1 : vector<8x128xf32>, i32 -> vector<8x128xf32>
    %c1_i32_2 = arith.constant 1 : i32
    %8 = tpu.dynamic_rotate %1 by %c1_i32_2 dim 1 : vector<8x128xf32>, i32 -> vector<8x128xf32>
    %9 = arith.select %6, %1, %8 : vector<8x128xi1>, vector<8x128xf32>
    %10 = arith.select %6, %7, %1 : vector<8x128xi1>, vector<8x128xf32>
    %11 = arith.mulf %9, %9 : vector<8x128xf32>
    %cst = arith.constant 1.000000e+00 : f32
    %12 = vector.broadcast %cst : f32 to vector<8x128xf32>
    %13 = arith.subf %12, %11 : vector<8x128xf32>
    %14 = vector.broadcast %0 : f32 to vector<8x128xf32>
    %15 = arith.mulf %14, %13 : vector<8x128xf32>
    %cst_3 = arith.constant 0.000000e+00 : f32
    %16 = vector.broadcast %cst_3 : f32 to vector<8x128xf32>
    %17 = arith.subf %16, %9 : vector<8x128xf32>
    %18 = arith.mulf %15, %10 : vector<8x128xf32>
    %19 = arith.addf %17, %18 : vector<8x128xf32>
    %cst_4 = arith.constant 2.000000e+00 : f32
    %20 = arith.mulf %cst_4, %0 : f32
    %21 = vector.broadcast %20 : f32 to vector<8x128xf32>
    %22 = arith.mulf %21, %9 : vector<8x128xf32>
    %23 = arith.mulf %22, %10 : vector<8x128xf32>
    %cst_5 = arith.constant -1.000000e+00 : f32
    %24 = vector.broadcast %cst_5 : f32 to vector<8x128xf32>
    %25 = arith.subf %24, %23 : vector<8x128xf32>
    %26 = arith.select %6, %10, %19 : vector<8x128xi1>, vector<8x128xf32>
    %c0_6 = arith.constant 0 : index
    %c0_7 = arith.constant 0 : index
    %27 = vector.load %arg3[%c0_6, %c0_7] : memref<8x128xf32, #tpu.memory_space<vmem>>, vector<8x128xf32>
    tpu.vector_store %arg3[%c0_6, %c0_7], %26 {strides = array<i32>} : memref<8x128xf32, #tpu.memory_space<vmem>>, vector<8x128xf32>,
    %28 = arith.select %6, %25, %15 : vector<8x128xi1>, vector<8x128xf32>
    %c0_8 = arith.constant 0 : index
    %c0_9 = arith.constant 0 : index
    %29 = vector.load %arg4[%c0_8, %c0_9] : memref<8x128xf32, #tpu.memory_space<vmem>>, vector<8x128xf32>
    tpu.vector_store %arg4[%c0_8, %c0_9], %28 {strides = array<i32>} : memref<8x128xf32, #tpu.memory_space<vmem>>, vector<8x128xf32>,
    return
  }
  func.func @transform_0(%arg0: i32) -> i32 {
    %c0_i32 = arith.constant 0 : i32
    %c0_i32_0 = arith.constant 0 : i32
    return %c0_i32 : i32
  }
  func.func @transform_1(%arg0: i32) -> (i32, i32) {
    %c0_i32 = arith.constant 0 : i32
    %c0_i32_0 = arith.constant 0 : i32
    return %arg0, %c0_i32 : i32, i32
  }
  func.func @transform_2(%arg0: i32) -> (i32, i32) {
    %c0_i32 = arith.constant 0 : i32
    %c0_i32_0 = arith.constant 0 : i32
    return %arg0, %c0_i32 : i32, i32
  }
  func.func @transform_3(%arg0: i32) -> (i32, i32) {
    %c0_i32 = arith.constant 0 : i32
    %c0_i32_0 = arith.constant 0 : i32
    return %arg0, %c0_i32 : i32, i32
  }
}

</mosaic_0001>

<llo_original>
// kernel: tpu_custom_call.1
$region0: #{tpu_custom_call.1}
  #allocation0 [shape = 'u32[]', space=smem, size = 0x4, offset = 0x4, fixed_abs, tag = 'smem constant byte address 0x4 - core index']
  #allocation1 [shape = 'u32[144,128]{1,0:T(1,128)}', space=vmem, size = 0x12000, scoped, tag = 'internal scratch']
  #allocation2 [shape = 'f32[1]{0:T(128)S(6)}', space=smem, size = 0x200, scoped, tag = 'scoped memory for tpu_custom_call.1']
  %s0 = inlined_call_operand.<no memory space> [shape: f32[1], index: 0, kind: input, shape index: {}]
  %s1 = inlined_call_operand.hbm [shape: f32[8,128], index: 1, kind: input, shape index: {}]
  %s2 = inlined_call_operand.hbm [shape: f32[8,128], index: 2, kind: output, shape index: {0}]
  %s3 = inlined_call_operand.hbm [shape: f32[8,128], index: 3, kind: output, shape index: {1}]
  %4 = xla_tuple %s2, %s3
  %s5 = sld [smem:[#allocation0]]
  $region30: #{tpu_custom_call.1} parent=0
    _
  %s7 = ssub.s32 1, %s5
  %s8 = scalar_select 0, %s7, %s5
  %9 = sst [smem:[#allocation2]] %s0
  $region1: #{tpu_custom_call.1} parent=0
    #allocation3 [shape = 'u8[4096]{0}', space=vmem, size = 0x1000, scoped, tag = 'input window, operand 1, single buffered']
    #allocation4 [shape = 's32[1]{0}', space=sflag, size = 0x4, scoped, tag = 'scoped memory for tpu_custom_call.1']
    #allocation5 [shape = 's32[1]{0}', space=sflag, size = 0x4, scoped, tag = 'scoped memory for tpu_custom_call.1']
    #allocation6 [shape = 'u8[4096]{0}', space=vmem, size = 0x1000, scoped, tag = 'output window, operand 0, single buffered']
    #allocation7 [shape = 'u8[4096]{0}', space=vmem, size = 0x1000, scoped, tag = 'output window, operand 1, single buffered']
    #allocation8 [shape = 's32[1]{0}', space=sflag, size = 0x4, scoped, tag = 'scoped memory for tpu_custom_call.1']
    %10 = vsyncpa [#allocation4], 0
    %11 = vsyncpa [#allocation5], 0
    %12 = vsyncpa [#allocation8], 0
    // Predicated region
    $region2: #{tpu_custom_call.1} parent=1 // pred_check
      _
    $region3: #{tpu_custom_call.1} parent=1 // pred_check_branch
      %14 = sbr.rel (0) target = $region5
    $region4: #{tpu_custom_call.1} parent=1 // pred_region
      _
    $region5: #{tpu_custom_call.1} parent=1 // pred_fallthru
      _
    // Predicated region
    $region6: #{tpu_custom_call.1} parent=1 // pred_check
      _
    $region7: #{tpu_custom_call.1} parent=1 // pred_check_branch
      %16 = sbr.rel (0) target = $region9
    $region8: #{tpu_custom_call.1} parent=1 // pred_region
      %s18 = ssub.s32 128, 128
      %19 = vsyncadd [#allocation4], %s18
      %s21 = sshll.u32 [#allocation3], 4
      %s22 = int_to_ptr.vmem [resolvable:$true] %s21
      %24 = dma.hbm_to_vmem [thread:$0]  %s1, 128, %s22, [#allocation4]
    $region9: #{tpu_custom_call.1} parent=1 // pred_fallthru
      _
    // Predicated region
    $region10: #{tpu_custom_call.1} parent=1 // pred_check
      _
    $region11: #{tpu_custom_call.1} parent=1 // pred_check_branch
      %26 = sbr.rel (0) target = $region13
    $region12: #{tpu_custom_call.1} parent=1 // pred_region
      %27 = dma.done [#allocation4], 128
    $region13: #{tpu_custom_call.1} parent=1 // pred_fallthru
      _
    %s28 = sld [smem:[#allocation2]]
    %v29 = vld [vmem:[#allocation3] sm:$0xff]
    %v30 = vlaneseq
    %v31 = vand.u32 %v30, 127
    %v32 = vand.u32 %v31, 1
    %vm33 = vcmp.eq.s32.totalorder %v32, 0
    %34 = vrot.lane.b32.xlu0 %v29, 127
    %v35 = vpop.permute.xlu0 %34
    %36 = vrot.lane.b32.xlu0 %v29, 1
    %v37 = vpop.permute.xlu0 %36
    %v38 = vsel %vm33, %v29, %v37
    %v39 = vsel %vm33, %v35, %v29
    %v40 = vmul.f32 %v38, %v38
    %v41 = vsub.f32 1.0, %v40
    %v42 = vstv %s28
    %v43 = vmul.f32 %v42, %v41
    %v44 = vsub.f32 0.0, %v38
    %v45 = vmul.f32 %v43, %v39
    %v46 = vadd.f32 %v44, %v45
    %s47 = smul.f32 %s28, 2.0
    %v48 = vstv %s47
    %v49 = vmul.f32 %v48, %v38
    %v50 = vmul.f32 %v49, %v39
    %v51 = vsub.f32 -1.0, %v50
    %v52 = vsel %vm33, %v35, %v46
    %53 = vst [vmem:[#allocation6] sm:$0xff] %v52
    %v54 = vsel %vm33, %v51, %v43
    %55 = vst [vmem:[#allocation7] sm:$0xff] %v54
    // Predicated region
    $region14: #{tpu_custom_call.1} parent=1 // pred_check
      _
    $region15: #{tpu_custom_call.1} parent=1 // pred_check_branch
      %57 = sbr.rel (0) target = $region17
    $region16: #{tpu_custom_call.1} parent=1 // pred_region
      %s59 = ssub.s32 128, 128
      %60 = vsyncadd [#allocation5], %s59
      %s62 = sshll.u32 [#allocation6], 4
      %s63 = int_to_ptr.vmem [resolvable:$true] %s62
      %65 = dma.vmem_to_hbm [thread:$0]  %s63, 128, %s2, [#allocation5]
    $region17: #{tpu_custom_call.1} parent=1 // pred_fallthru
      _
    // Predicated region
    $region18: #{tpu_custom_call.1} parent=1 // pred_check
      _
    $region19: #{tpu_custom_call.1} parent=1 // pred_check_branch
      %67 = sbr.rel (0) target = $region21
    $region20: #{tpu_custom_call.1} parent=1 // pred_region
      %s69 = ssub.s32 128, 128
      %70 = vsyncadd [#allocation8], %s69
      %s72 = sshll.u32 [#allocation7], 4
      %s73 = int_to_ptr.vmem [resolvable:$true] %s72
      %75 = dma.vmem_to_hbm [thread:$0]  %s73, 128, %s3, [#allocation8]
    $region21: #{tpu_custom_call.1} parent=1 // pred_fallthru
      _
    // Predicated region
    $region22: #{tpu_custom_call.1} parent=1 // pred_check
      _
    $region23: #{tpu_custom_call.1} parent=1 // pred_check_branch
      %77 = sbr.rel (0) target = $region25
    $region24: #{tpu_custom_call.1} parent=1 // pred_region
      %78 = dma.done [#allocation5], 128
    $region25: #{tpu_custom_call.1} parent=1 // pred_fallthru
      _
    // Predicated region
    $region26: #{tpu_custom_call.1} parent=1 // pred_check
      _
    $region27: #{tpu_custom_call.1} parent=1 // pred_check_branch
      %80 = sbr.rel (0) target = $region29
    $region28: #{tpu_custom_call.1} parent=1 // pred_region
      %81 = dma.done [#allocation8], 128
    $region29: #{tpu_custom_call.1} parent=1 // pred_fallthru
      _
    %82 = vsyncpa [#allocation4], 1
    %83 = vsyncpa [#allocation5], 1
    %84 = vsyncpa [#allocation8], 1

</llo_original>
